<compile_context>
chip_gen: v6e
topology: v6e:2x2x1
jax: 0.10.0
libtpu: 0.0.40
codegen_flags: <defaults>
</compile_context>

<pallas_src>
import jax
import jax.numpy as jnp
from jax.experimental import pallas as pl
from jax.experimental.pallas import tpu as pltpu


# ---------------------------------------------------------------------------
# Pass 1: tiled squeeze (numerator of the global average pool).
# ---------------------------------------------------------------------------
def _make_squeeze_kernel(mask_tail, tail_len):
    """Builds the pass-1 kernel; mask code is only emitted when needed."""

    def kernel(x_ref, sum_ref):
        # x_ref:   (1, C, S_T)  current tile of the input
        # sum_ref: (1, C, 1)    per-(b, c) running sum; resident across S axis
        si = pl.program_id(1)

        @pl.when(si == 0)
        def _init():
            sum_ref[...] = jnp.zeros_like(sum_ref)

        def _accum(xv):
            part = jnp.sum(xv.astype(jnp.float32), axis=-1, keepdims=True)
            sum_ref[...] += part[None]                      # (1, C, 1)

        if mask_tail:
            # Ragged last tile: out-of-bounds lanes hold unspecified data,
            # so zero them before accumulating.  Only the last tile pays.
            last = pl.num_programs(1) - 1

            @pl.when(si != last)
            def _full():
                _accum(x_ref[0])

            @pl.when(si == last)
            def _partial():
                x = x_ref[0]
                lane = jax.lax.broadcasted_iota(jnp.int32, x.shape, 1)
                _accum(jnp.where(lane < tail_len, x, jnp.zeros_like(x)))
        else:
            _accum(x_ref[0])

    return kernel


# ---------------------------------------------------------------------------
# Pass 2: fused cSE scale  +  sSE (1x1x1 conv -> sigmoid)  +  elementwise max.
# ---------------------------------------------------------------------------
def _scale_combine_kernel(x_ref, cs_ref, wsp_ref, bsp_ref, o_ref):
    # x_ref:   (1, C, S_T)  input tile
    # cs_ref:  (1, C, 1)    channel-SE scale for this batch row (x.dtype)
    # wsp_ref: (1, C)       1x1x1 conv weight, lane-dense row (x.dtype)
    # bsp_ref: (1, 1)       conv bias (f32)
    # o_ref:   (1, C, S_T)
    x = x_ref[0]                                            # (C, S_T)

    # channel-SE branch: per-channel broadcast multiply (lane broadcast).
    c_se = x * cs_ref[0]                                    # (C, S_T)

    # spatial-SE branch: channel contraction on the MXU, f32 accumulate.
    conv = jnp.dot(wsp_ref[...], x,
                   preferred_element_type=jnp.float32)      # (1, S_T)
    z = conv + bsp_ref[...]
    s_map = (1.0 / (1.0 + jnp.exp(-z))).astype(x.dtype)     # sigmoid, EUP
    s_se = x * s_map                                        # sublane broadcast

    o_ref[...] = jnp.maximum(c_se, s_se)[None].astype(o_ref.dtype)


# ---------------------------------------------------------------------------
# Wrapper
# ---------------------------------------------------------------------------
def _largest_div128_divisor(s, cap):
    """Largest divisor of s that is a multiple of 128 and <= cap (0 if none)."""
    if s % 128:
        return 0
    m = s // 128
    best = 0
    d = 1
    while d * d <= m:
        if m % d == 0:
            for q in (d, m // d):
                c = q * 128
                if best < c <= cap:
                    best = c
        d += 1
    return best


def channel_spatial_se_3d(x, w1, b1, w2, b2, w_sp, b_sp,
                          *, block_budget_bytes=6 * 1024 * 1024):
    """
    Forward pass of ChannelSpatialSELayer3D.

    x:    (B, C, D, H, W)
    w1:   (Cr, C), b1: (Cr,)    fc1 (PyTorch Linear layout: (out, in))
    w2:   (C, Cr), b2: (C,)     fc2
    w_sp: (C,),    b_sp: ()     Conv3d(C, 1, kernel_size=1) weight / bias
    """
    B, C, D, H, W = x.shape
    S = D * H * W
    itemsize = jnp.dtype(x.dtype).itemsize

    # ---- S-tile selection: no HBM padding, true-S output -------------------
    cap = max(128, (block_budget_bytes // (C * itemsize)) // 128 * 128)
    if S <= cap:
        S_T = S                       # full-extent minor dim: always legal
    else:
        S_T = cap
        exact = _largest_div128_divisor(S, cap)
        if exact * 2 >= cap:          # exact tiling within 2x of the cap
            S_T = exact
    n_s = -(-S // S_T)                # ceil-grid; ragged tail handled in-kernel
    mask_tail = (S % S_T) != 0
    tail_len = S - (n_s - 1) * S_T

    x_flat = x.reshape(B, C, S)
    grid = (B, n_s)
    x_spec = pl.BlockSpec((1, C, S_T), lambda b, si: (b, 0, si))
    vmem_limit = 48 * 1024 * 1024     # < 64 MiB physical on v7x

    # ---- pass 1: per-(b, c) spatial sums ------------------------------------
    sums = pl.pallas_call(
        _make_squeeze_kernel(mask_tail, tail_len),
        out_shape=jax.ShapeDtypeStruct((B, C, 1), jnp.float32),
        grid_spec=pltpu.PrefetchScalarGridSpec(
            num_scalar_prefetch=0,
            grid=grid,
            in_specs=[x_spec],
            out_specs=pl.BlockSpec((1, C, 1), lambda b, si: (b, 0, 0)),
        ),
        compiler_params=pltpu.CompilerParams(
            dimension_semantics=("parallel", "arbitrary"),
            vmem_limit_bytes=vmem_limit),
    )(x_flat)

    # ---- excitation MLP, hoisted out of the grid loop (tiny: B x C) ---------
    squeeze = sums.reshape(B, C) / jnp.float32(S)              # true-S mean
    h = jnp.maximum(squeeze @ w1.T + b1, 0.0)                  # (B, Cr)
    cse_scale = jax.nn.sigmoid(h @ w2.T + b2)                  # (B, C), f32
    cse_col = cse_scale.reshape(B, C, 1).astype(x.dtype)       # pre-cast

    wsp_row = w_sp.reshape(1, C).astype(x.dtype)               # lane-dense MXU weight
    bsp_2d = jnp.asarray(b_sp, jnp.float32).reshape(1, 1)

    # ---- pass 2: fused cSE scale / sSE conv+sigmoid / max -------------------
    out_flat = pl.pallas_call(
        _scale_combine_kernel,
        out_shape=jax.ShapeDtypeStruct((B, C, S), x.dtype),
        grid_spec=pltpu.PrefetchScalarGridSpec(
            num_scalar_prefetch=0,
            grid=grid,
            in_specs=[
                x_spec,
                pl.BlockSpec((1, C, 1), lambda b, si: (b, 0, 0)),
                pl.BlockSpec((1, C), lambda b, si: (0, 0)),
                pl.BlockSpec((1, 1), lambda b, si: (0, 0)),
            ],
            out_specs=x_spec,
        ),
        compiler_params=pltpu.CompilerParams(
            dimension_semantics=("parallel", "parallel"),
            vmem_limit_bytes=vmem_limit),
    )(x_flat, cse_col, wsp_row, bsp_2d)

    return out_flat.reshape(B, C, D, H, W)


# ---------------------------------------------------------------------------
# Parameters & reference
# ---------------------------------------------------------------------------
def init_params(key, num_channels, reduction_ratio=2):
    """Deterministic synthetic parameters with PyTorch layouts/default init."""
    if num_channels == 1:
        reduction_ratio = 1
    cr = num_channels // reduction_ratio
    k = jax.random.split(key, 6)
    lim1 = 1.0 / (num_channels ** 0.5)     # fc1 fan_in = C
    lim2 = 1.0 / (cr ** 0.5)               # fc2 fan_in = Cr
    limc = 1.0 / (num_channels ** 0.5)     # Conv3d fan_in = C*1*1*1
    w1 = jax.random.uniform(k[0], (cr, num_channels), jnp.float32, -lim1, lim1)
    b1 = jax.random.uniform(k[1], (cr,), jnp.float32, -lim1, lim1)
    w2 = jax.random.uniform(k[2], (num_channels, cr), jnp.float32, -lim2, lim2)
    b2 = jax.random.uniform(k[3], (num_channels,), jnp.float32, -lim2, lim2)
    w_sp = jax.random.uniform(k[4], (num_channels,), jnp.float32, -limc, limc)
    b_sp = jax.random.uniform(k[5], (), jnp.float32, -limc, limc)
    return w1, b1, w2, b2, w_sp, b_sp


def _reference(x, w1, b1, w2, b2, w_sp, b_sp):
    """Plain-JAX mirror of ChannelSpatialSELayer3D.forward for validation."""
    squeeze = jnp.mean(x, axis=(2, 3, 4))                          # (B, C)
    h = jnp.maximum(squeeze @ w1.T + b1, 0.0)
    cscale = jax.nn.sigmoid(h @ w2.T + b2)
    c_se = x * cscale[:, :, None, None, None]
    conv = jnp.einsum("bcdhw,c->bdhw", x, w_sp) + b_sp
    s_se = x * jax.nn.sigmoid(conv)[:, None]
    return jnp.maximum(c_se, s_se)


if __name__ == "__main__":
    key = jax.random.PRNGKey(0)
    kx, kp = jax.random.split(key)

    B, C, D, H, W = 2, 4, 8, 8, 8
    x = jax.random.normal(kx, (B, C, D, H, W), dtype=jnp.float32)
    params = init_params(kp, C, reduction_ratio=2)

    out = channel_spatial_se_3d(x, *params)
    out = jax.block_until_ready(out)

    ref = _reference(x, *params)
    assert out.shape == (B, C, D, H, W)
    # Tolerance covers MXU default-precision matmul for the f32 sSE conv
    # (kernel) vs. the XLA einsum (reference); both are O(1e-4) of each other.
    err = float(jnp.max(jnp.abs(out - ref)))
    assert jnp.allclose(out, ref, atol=2e-3, rtol=2e-3), err

    print("KERNEL_OK")
</pallas_src>

<mosaic_0001>
module attributes {stable_mosaic.version = 11 : i64} {
  func.func @kernel(%arg0: i32, %arg1: i32, %arg2: memref<1x4x512xf32, #tpu.memory_space<vmem>>, %arg3: memref<1x4x1xf32, #tpu.memory_space<vmem>>) attributes {dimension_semantics = [#tpu.dimension_semantics<parallel>, #tpu.dimension_semantics<arbitrary>], iteration_bounds = array<i64: 2, 1>, scalar_prefetch = 0 : i64, scratch_operands = 0 : i64, tpu.core_type = #tpu.core_type<tc>, window_params = [{transform_indices = @transform_0, window_bounds = array<i64: 1, 4, 512>}, {transform_indices = @transform_1, window_bounds = array<i64: 1, 4, 1>}]} {
    %c0_i32 = arith.constant 0 : i32
    %0 = arith.cmpi eq, %arg1, %c0_i32 : i32
    %1 = arith.extui %0 : i1 to i32
    %c0_i32_0 = arith.constant 0 : i32
    %2 = arith.cmpi ne, %1, %c0_i32_0 : i32
    scf.if %2 {
      %cst_9 = arith.constant 0.000000e+00 : f32
      %11 = vector.broadcast %cst_9 : f32 to vector<1x4x1xf32>
      %c0_10 = arith.constant 0 : index
      %c0_11 = arith.constant 0 : index
      %c0_12 = arith.constant 0 : index
      %12 = vector.load %arg3[%c0_10, %c0_11, %c0_12] : memref<1x4x1xf32, #tpu.memory_space<vmem>>, vector<1x4x1xf32>
      tpu.vector_store %arg3[%c0_10, %c0_11, %c0_12], %11 {strides = array<i32>} : memref<1x4x1xf32, #tpu.memory_space<vmem>>, vector<1x4x1xf32>,
    } else {
    }
    %c0 = arith.constant 0 : index
    %c0_1 = arith.constant 0 : index
    %c0_2 = arith.constant 0 : index
    %3 = vector.load %arg2[%c0, %c0_1, %c0_2] : memref<1x4x512xf32, #tpu.memory_space<vmem>>, vector<1x4x512xf32>
    %4 = vector.shape_cast %3 : vector<1x4x512xf32> to vector<4x512xf32>
    %cst = arith.constant dense<0.000000e+00> : vector<4xf32>
    %5 = vector.multi_reduction <add>, %4, %cst [1] : vector<4x512xf32> to vector<4xf32>
    %6 = vector.shape_cast %5 : vector<4xf32> to vector<4x1xf32>
    %c0_3 = arith.constant 0 : index
    %c0_4 = arith.constant 0 : index
    %c0_5 = arith.constant 0 : index
    %7 = vector.load %arg3[%c0_3, %c0_4, %c0_5] : memref<1x4x1xf32, #tpu.memory_space<vmem>>, vector<1x4x1xf32>
    %8 = vector.shape_cast %6 : vector<4x1xf32> to vector<1x4x1xf32>
    %9 = arith.addf %7, %8 : vector<1x4x1xf32>
    %c0_6 = arith.constant 0 : index
    %c0_7 = arith.constant 0 : index
    %c0_8 = arith.constant 0 : index
    %10 = vector.load %arg3[%c0_6, %c0_7, %c0_8] : memref<1x4x1xf32, #tpu.memory_space<vmem>>, vector<1x4x1xf32>
    tpu.vector_store %arg3[%c0_6, %c0_7, %c0_8], %9 {strides = array<i32>} : memref<1x4x1xf32, #tpu.memory_space<vmem>>, vector<1x4x1xf32>,
    return
  }
  func.func @transform_0(%arg0: i32, %arg1: i32) -> (i32, i32, i32) {
    %c0_i32 = arith.constant 0 : i32
    %c0_i32_0 = arith.constant 0 : i32
    return %arg0, %c0_i32, %arg1 : i32, i32, i32
  }
  func.func @transform_1(%arg0: i32, %arg1: i32) -> (i32, i32, i32) {
    %c0_i32 = arith.constant 0 : i32
    %c0_i32_0 = arith.constant 0 : i32
    %c0_i32_1 = arith.constant 0 : i32
    return %arg0, %c0_i32, %c0_i32_0 : i32, i32, i32
  }
}

</mosaic_0001>

<llo_original>
// kernel: tpu_custom_call.1
$region0: #{tpu_custom_call.1}
  #allocation0 [shape = 'u32[]', space=smem, size = 0x4, offset = 0x4, fixed_abs, tag = 'smem constant byte address 0x4 - core index']
  #allocation1 [shape = 'u32[144,128]{1,0:T(1,128)}', space=vmem, size = 0x12000, scoped, tag = 'internal scratch']
  %s0 = inlined_call_operand.hbm [shape: f32[2,4,512], index: 0, kind: input, shape index: {}]
  %s1 = inlined_call_operand.vmem [shape: f32[2,4,1], index: 1, kind: output, shape index: {}]
  %s2 = sld [smem:[#allocation0]]
  $region45: #{tpu_custom_call.1} parent=0
    _
  %s4 = ssub.s32 1, %s2
  %s5 = scalar_select 0, %s4, %s2
  $region1: #{tpu_custom_call.1} parent=0
    #allocation2 [shape = 'u8[16384]{0}', space=vmem, size = 0x4000, scoped, tag = 'input window, operand 0']
    #allocation3 [shape = 's32[2]{0}', space=sflag, size = 0x8, scoped, tag = 'scoped memory for tpu_custom_call.1']
    %6 = vsyncpa [#allocation3], 0
    %s7 = scalar_lea.sflag [#allocation3], 1
    %8 = vsyncpa %s7, 0
    loop: start=0, step=1, limit=4
    $region2: #{tpu_custom_call.1} parent=1 // loop_pre_header
      _
    $region3: #{tpu_custom_call.1} parent=1 // loop_header
      %s10 = sphi 0, %s14
      %p11 = scmp.ge.s32.totalorder %s10, 4
      %s17 = sphi 0, %s29
      %s18 = sphi 0, %s25
      %s19 = sphi 0, %s17
      %s20 = sphi 0, %s18
      %s21 = sphi 0, %s19
      %s22 = sphi 0, %s20
      %s34 = sphi 0, %s36
      %s37 = sphi 0, %s34
      %s38 = sphi 0, %s37
      %s54 = sphi 0, %s38
      %s60 = sphi 0, %s62
      %s63 = sphi 0, %s60
      %s64 = sphi 0, %s63
      %s80 = sphi 0, %s64
    $region4: #{tpu_custom_call.1} parent=1 // loop_header_branch
      %13 = sbr.rel (%p11) target = $region8
    $region5: #{tpu_custom_call.1} parent=1 // loop_body
      %s15 = ssub.s32 %s10, 1
      %s16 = ssub.s32 %s10, 2
      %s23 = sadd.s32 1, %s18
      %p24 = scmp.ge.s32.totalorder %s23, 1
      %s25 = scalar_select %p24, 0, %s23
      %s26 = sadd.s32 1, %s17
      %s27 = scalar_select %p24, %s26, %s17
      %p28 = scmp.ge.s32.totalorder %s27, 2
      %s29 = scalar_select %p28, 0, %s27
      %s30 = ssub.s32 %s17, %s29
      %s31 = ssub.s32 %s18, %s25
      %s32 = sor.u32 %s30, %s31
      %p33 = scmp.eq.s32.totalorder %s32, 0
      %s35 = sadd.s32 %s34, 1
      %s36 = scalar_select %p33, %s34, %s35
      %p39 = pneg %p33
      %p40 = scmp.eq.s32.totalorder %s10, 1
      %p41 = por %p39, %p40
      %p42 = scmp.ne.s32.totalorder %s34, %s37
      %p43 = scmp.eq.s32.totalorder %s10, 0
      %p44 = por %p42, %p43
      %p45 = scmp.ne.s32.totalorder %s34, %s37
      %p46 = scmp.eq.s32.totalorder %s15, 1
      %p47 = por %p45, %p46
      %p48 = scmp.ne.s32.totalorder %s37, %s38
      %p49 = scmp.eq.s32.totalorder %s15, 0
      %p50 = por %p48, %p49
      %p51 = scmp.ne.s32.totalorder %s37, %s38
      %p52 = scmp.eq.s32.totalorder %s16, 1
      %p53 = por %p51, %p52
      %p55 = scmp.ne.s32.totalorder %s38, %s54
      %p56 = scmp.eq.s32.totalorder %s16, 0
      %p57 = por %p55, %p56
      %s58 = ssub.s32 %s17, %s29
      %p59 = scmp.eq.s32.totalorder %s58, 0
      %s61 = sadd.s32 %s60, 1
      %s62 = scalar_select %p59, %s60, %s61
      %p65 = pneg %p59
      %p66 = scmp.eq.s32.totalorder %s10, 1
      %p67 = por %p65, %p66
      %p68 = scmp.ne.s32.totalorder %s60, %s63
      %p69 = scmp.eq.s32.totalorder %s10, 0
      %p70 = por %p68, %p69
      %p71 = scmp.ne.s32.totalorder %s60, %s63
      %p72 = scmp.eq.s32.totalorder %s15, 1
      %p73 = por %p71, %p72
      %p74 = scmp.ne.s32.totalorder %s63, %s64
      %p75 = scmp.eq.s32.totalorder %s15, 0
      %p76 = por %p74, %p75
      %p77 = scmp.ne.s32.totalorder %s63, %s64
      %p78 = scmp.eq.s32.totalorder %s16, 1
      %p79 = por %p77, %p78
      %p81 = scmp.ne.s32.totalorder %s64, %s80
      %p82 = scmp.eq.s32.totalorder %s16, 0
      %p83 = por %p81, %p82
      %p84 = scmp.le.s32.totalorder 1, %s10
      %p85 = scmp.lt.s32.totalorder %s10, 3
      %p86 = pnand %p84, %p85
      %p87 = pneg %p86
      // Predicated region
      $region9: #{tpu_custom_call.1} parent=5 // pred_check
        _
      $region10: #{tpu_custom_call.1} parent=5 // pred_check_branch
        %89 = sbr.rel (%p86) target = $region12
      $region11: #{tpu_custom_call.1} parent=5 // pred_region
        %s90 = ssub.s32 %s10, 1
      $region12: #{tpu_custom_call.1} parent=5 // pred_fallthru
        _
      %p91 = scmp.lt.s32.totalorder %s10, 2
      // Predicated region
      $region13: #{tpu_custom_call.1} parent=5 // pred_check
        %p92 = pneg %p91
      $region14: #{tpu_custom_call.1} parent=5 // pred_check_branch
        %94 = sbr.rel (%p92) target = $region16
      $region15: #{tpu_custom_call.1} parent=5 // pred_region
        // Predicated region
        $region17: #{tpu_custom_call.1} parent=15 // pred_check
          %p95 = pneg %p44
        $region18: #{tpu_custom_call.1} parent=15 // pred_check_branch
          %97 = sbr.rel (%p95) target = $region20
        $region19: #{tpu_custom_call.1} parent=15 // pred_region
          %s98 = sand.u32 %s34, 1
          %s99 = scalar_lea.sflag [#allocation3], %s98
          %s100 = sand.u32 %s34, 1
          %s101 = smul.addr %s100, 16
          %s102 = scalar_lea.vmem [#allocation2], %s101
          %s103 = smul.u32 4, %s18
          %s105 = ssub.s32 256, 256
          %106 = vsyncadd %s99, %s105
          %s107 = smul.addr %s17, 4
          %s108 = sadd.s32 %s103, %s107
          %s109 = smul.addr %s108, 64
          %s110 = scalar_lea.hbm %s0, %s109
          %s112 = sshll.u32 %s102, 4
          %s113 = int_to_ptr.vmem [resolvable:$true] %s112
          %115 = dma.hbm_to_vmem [thread:$0]  %s110, 256, %s113, %s99
        $region20: #{tpu_custom_call.1} parent=15 // pred_fallthru
          _
      $region16: #{tpu_custom_call.1} parent=5 // pred_fallthru
        _
      %p116 = scmp.le.s32.totalorder 1, %s10
      %p117 = scmp.lt.s32.totalorder %s10, 3
      %p118 = pnand %p116, %p117
      %p119 = pneg %p118
      // Predicated region
      $region21: #{tpu_custom_call.1} parent=5 // pred_check
        _
      $region22: #{tpu_custom_call.1} parent=5 // pred_check_branch
        %121 = sbr.rel (%p118) target = $region24
      $region23: #{tpu_custom_call.1} parent=5 // pred_region
        %s122 = ssub.s32 %s10, 1
        %s123 = sand.u32 %s37, 1
        %s124 = scalar_lea.sflag [#allocation3], %s123
        %s125 = sand.u32 %s37, 1
        %s126 = smul.addr %s125, 16
        %s127 = scalar_lea.vmem [#allocation2], %s126
        // Predicated region
        $region25: #{tpu_custom_call.1} parent=23 // pred_check
          %p128 = pneg %p50
        $region26: #{tpu_custom_call.1} parent=23 // pred_check_branch
          %130 = sbr.rel (%p128) target = $region28
        $region27: #{tpu_custom_call.1} parent=23 // pred_region
          %131 = dma.done %s124, 256
        $region28: #{tpu_custom_call.1} parent=23 // pred_fallthru
          _
        %s132 = sand.u32 %s37, 1
        %s133 = scalar_lea.sflag [#allocation3], %s132
        %s134 = sand.u32 %s37, 1
        %s135 = smul.addr %s134, 16
        %s136 = scalar_lea.vmem [#allocation2], %s135
        %p137 = pneg %p50
        %p138 = pneg %p47
        %p139 = pneg %p76
        %p140 = pneg %p73
        %p141 = scmp.lt.s32.totalorder %s19, 1
        %s142 = scalar_select %p141, %s19, 1
        %s143 = smul.addr %s142, 4
        %s144 = scalar_lea.vmem %s1, %s143
        %s145 = smul.u32 4, %s20
        %p146 = scmp.lt.s32.totalorder %s19, 1
        %s147 = scalar_select %p146, %s19, 1
        %s148 = smul.addr %s147, 4
        %s149 = scalar_lea.vmem %s1, %s148
        %p150 = scmp.eq.s32.totalorder %s20, 0
        // Predicated region
        $region29: #{tpu_custom_call.1} parent=23 // pred_check
          %p151 = pneg %p150
        $region30: #{tpu_custom_call.1} parent=23 // pred_check_branch
          %153 = sbr.rel (%p151) target = $region32
        $region31: #{tpu_custom_call.1} parent=23 // pred_region
          %vm154 = vcmask 3072
          %155 = vst.msk [vmem:[%s149] sm:$0xf] %vm154, 0.0
        $region32: #{tpu_custom_call.1} parent=23 // pred_fallthru
          _
        %v156 = vld [vmem:[%s127] sm:$0xff]
        %v157 = vld [vmem:[%s127 + $0x8] sm:$0xff]
        %v160 = vcombine.high %v156, %v156
        %v161 = vcombine.high %v157, %v157
        %vm164 = vcmask 1043456
        %v165 = vsel %vm164, %v156, 0.0
        %v166 = vsel %vm164, %v160, 0.0
        %v167 = vadd.f32 %v165, %v166
        %v168 = vsel %vm164, %v157, 0.0
        %v169 = vadd.f32 %v167, %v168
        %v170 = vsel %vm164, %v161, 0.0
        %v171 = vadd.f32 %v169, %v170
        %172 = vadd.xlane.f32.xlu0 %v171
        %v173 = vpop.xlane.xlu0 %172
        %v174 = vld [vmem:[%s149] sm:$0xf]
        %v175 = vadd.f32 %v174, %v173
        %vm176 = vcmask 3072
        %177 = vst.msk [vmem:[%s149] sm:$0xf] %vm176, %v175
        %p178 = scmp.lt.s32.totalorder %s19, 1
        %s179 = scalar_select %p178, %s19, 1
        %s180 = smul.addr %s179, 4
        %s181 = scalar_lea.vmem %s1, %s180
        // Predicated region
        $region33: #{tpu_custom_call.1} parent=23 // pred_check
          %p182 = pneg %p73
        $region34: #{tpu_custom_call.1} parent=23 // pred_check_branch
          %184 = sbr.rel (%p182) target = $region36
        $region35: #{tpu_custom_call.1} parent=23 // pred_region
          _
        $region36: #{tpu_custom_call.1} parent=23 // pred_fallthru
          _
      $region24: #{tpu_custom_call.1} parent=5 // pred_fallthru
        _
      %p185 = scmp.le.s32.totalorder 2, %s10
      // Predicated region
      $region37: #{tpu_custom_call.1} parent=5 // pred_check
        %p186 = pneg %p185
      $region38: #{tpu_custom_call.1} parent=5 // pred_check_branch
        %188 = sbr.rel (%p186) target = $region40
      $region39: #{tpu_custom_call.1} parent=5 // pred_region
        %s189 = ssub.s32 %s10, 2
        // Predicated region
        $region41: #{tpu_custom_call.1} parent=39 // pred_check
          %p190 = pneg %p79
        $region42: #{tpu_custom_call.1} parent=39 // pred_check_branch
          %192 = sbr.rel (%p190) target = $region44
        $region43: #{tpu_custom_call.1} parent=39 // pred_region
          %p193 = scmp.lt.s32.totalorder %s21, 1
          %s194 = scalar_select %p193, %s21, 1
          %s195 = smul.addr %s194, 4
          %s196 = scalar_lea.vmem %s1, %s195
        $region44: #{tpu_custom_call.1} parent=39 // pred_fallthru
          _
      $region40: #{tpu_custom_call.1} parent=5 // pred_fallthru
        _
    $region6: #{tpu_custom_call.1} parent=1 // loop_footer
      %s14 = sadd.s32 1, %s10
    $region7: #{tpu_custom_call.1} parent=1 // loop_footer_branch
      %9 = sbr.rel target = $region3
    $region8: #{tpu_custom_call.1} parent=1 // loop_exit
      _
    %197 = vsyncpa [#allocation3], 1
    %s198 = scalar_lea.sflag [#allocation3], 1
    %199 = vsyncpa %s198, 1

</llo_original>
